<compile_context>
chip_gen: v5e
topology: v5e:2x2
jax: 0.10.0
libtpu: 0.0.40
codegen_flags: <defaults>
</compile_context>

<pallas_src>
import functools
import math

import jax
import jax.numpy as jnp
from jax.experimental import pallas as pl
from jax.experimental.pallas import tpu as pltpu

EPS = 1e-5


# ----------------------------------------------------------------------------
# Kernels
# ----------------------------------------------------------------------------

def _resident_kernel(x_ref, w_ref, gb_ref, o_ref, *, mxu_dtype):
    """Full batch resident in VMEM; grid iterates only the Cout axis.

    One traversal of y for the stats (sum / sum-of-squares), one fused
    affine+ReLU traversal for the store.  No (N, tn) centered temporary.
    """
    x = x_ref[...]
    if mxu_dtype is not None and x.dtype != jnp.dtype(mxu_dtype):
        x = x.astype(mxu_dtype)  # in-kernel cast: hidden under the MXU, no extra HBM pass
    y = jnp.dot(x, w_ref[...], preferred_element_type=jnp.float32)  # (N, tn) f32

    n = jnp.float32(y.shape[0])
    mean = jnp.sum(y, axis=0, keepdims=True) / n                     # (1, tn)
    var = jnp.maximum(jnp.sum(y * y, axis=0, keepdims=True) / n - mean * mean, 0.0)

    gamma = gb_ref[0:1, :]
    beta = gb_ref[1:2, :]
    scale = gamma * jax.lax.rsqrt(var + EPS)                         # (1, tn)
    shift = beta - mean * scale                                      # (1, tn)

    o_ref[...] = jnp.maximum(y * scale + shift, 0.0).astype(o_ref.dtype)


def _tiled_kernel(x_ref, w_ref, gb_ref, o_ref,
                  sum_ref, sumsq_ref, scale_ref, shift_ref, *,
                  n_total, mxu_dtype):
    """Two-phase, N-tiled scheme for batches that do not fit VMEM.

    grid = (Cout tiles, 2 phases, N tiles).
    Phase 0: accumulate per-channel sum / sumsq across N tiles (K=Cin is
    small, so recomputing the matmul in phase 1 is cheaper than spilling the
    (N, tn) f32 intermediate to HBM).
    Phase 1: recompute y per N tile and write max(y*scale + shift, 0).
    """
    p = pl.program_id(1)
    i = pl.program_id(2)
    last_i = pl.num_programs(2) - 1

    x = x_ref[...]
    if mxu_dtype is not None and x.dtype != jnp.dtype(mxu_dtype):
        x = x.astype(mxu_dtype)
    y = jnp.dot(x, w_ref[...], preferred_element_type=jnp.float32)  # (tm, tn)

    @pl.when(jnp.logical_and(p == 0, i == 0))
    def _():
        sum_ref[...] = jnp.zeros_like(sum_ref)
        sumsq_ref[...] = jnp.zeros_like(sumsq_ref)

    @pl.when(p == 0)
    def _():
        sum_ref[...] += jnp.sum(y, axis=0, keepdims=True)
        sumsq_ref[...] += jnp.sum(y * y, axis=0, keepdims=True)

    @pl.when(jnp.logical_and(p == 0, i == last_i))
    def _():
        n = jnp.float32(n_total)
        mean = sum_ref[...] / n
        var = jnp.maximum(sumsq_ref[...] / n - mean * mean, 0.0)
        gamma = gb_ref[0:1, :]
        beta = gb_ref[1:2, :]
        sc = gamma * jax.lax.rsqrt(var + EPS)
        scale_ref[...] = sc
        shift_ref[...] = beta - mean * sc

    @pl.when(p == 1)
    def _():
        o_ref[...] = jnp.maximum(y * scale_ref[...] + shift_ref[...],
                                 0.0).astype(o_ref.dtype)


# ----------------------------------------------------------------------------
# Wrapper
# ----------------------------------------------------------------------------

def _tpu_budget():
    """(tile-selection budget bytes, vmem_limit_bytes, tensorcores per chip)."""
    kind = ""
    try:
        kind = jax.devices()[0].device_kind.lower()
    except Exception:
        pass
    is_v7 = "v7" in kind
    physical = (64 << 20) if is_v7 else (128 << 20)
    try:
        physical = int(pltpu.get_tpu_info().vmem_capacity_bytes)
    except Exception:
        pass
    budget = int(physical * 0.625)   # ~80 MiB on v5e/v6e, ~40 MiB on v7x
    limit = int(physical * 0.75)     # ~96 MiB on v5e/v6e, ~48 MiB on v7x
    cores = 2 if is_v7 else 1        # v7x has 2 TensorCores per chip
    return budget, limit, cores


def conv_bn_relu_1d(x, weight_t, gamma, beta, bias=None, *,
                    mxu_dtype=None, out_dtype=jnp.float32,
                    force_tiled=False, tm=None, tn=None):
    """x: (N, Cin); weight_t: (Cin, Cout); gamma/beta: (1, Cout) or (Cout,).

    `bias` is accepted for nn.Linear(bias=True) parity but unused: under
    training-mode BatchNorm1d a per-channel constant bias is removed by the
    batch mean and leaves the variance unchanged (no effect on the output).
    `mxu_dtype=jnp.bfloat16` feeds the MXU in bf16 (f32 accumulation) and is
    beneficial on v5e, v6e and v7x alike; pass x already in bf16 to also
    halve the x DMA.  `out_dtype=jnp.bfloat16` halves the output HBM stream.
    """
    del bias  # provably a no-op under training-mode BN; see docstring.
    N, Cin = x.shape
    Cin_w, Cout = weight_t.shape
    assert Cin_w == Cin

    if mxu_dtype is not None and weight_t.dtype != jnp.dtype(mxu_dtype):
        weight_t = weight_t.astype(mxu_dtype)  # tiny, out of the hot path

    gb = jnp.concatenate([jnp.reshape(gamma, (1, Cout)),
                          jnp.reshape(beta, (1, Cout))],
                         axis=0).astype(jnp.float32)

    budget, vmem_limit, n_cores = _tpu_budget()
    x_elt = x.dtype.itemsize
    w_elt = weight_t.dtype.itemsize
    o_elt = jnp.dtype(out_dtype).itemsize

    # Candidate lane tiles: multiples of 128 dividing Cout, plus full Cout.
    cands = sorted({t for t in range(128, Cout + 1, 128) if Cout % t == 0}
                   | {Cout}, reverse=True)

    def resident_bytes(tn_):
        return (2 * N * Cin * x_elt          # x (double-buffered by pipeline)
                + 2 * Cin * tn_ * w_elt      # W tile
                + 2 * 2 * tn_ * 4            # [gamma; beta] tile
                + 2 * N * tn_ * o_elt        # output tile
                + N * tn_ * 4)               # f32 y intermediate

    def tiled_bytes(tm_, tn_):
        return (2 * tm_ * Cin * x_elt
                + 2 * Cin * tn_ * w_elt
                + 2 * 2 * tn_ * 4
                + 2 * tm_ * tn_ * o_elt
                + tm_ * tn_ * 4              # f32 y intermediate
                + 4 * 8 * tn_ * 4)           # stats / scale / shift scratch (padded)

    cost = pl.CostEstimate(
        flops=2 * N * Cin * Cout,
        transcendentals=0,
        bytes_accessed=(N * Cin * x_elt + Cin * Cout * w_elt
                        + 2 * Cout * 4 + N * Cout * o_elt))

    # ---- Path / tile selection ---------------------------------------------
    tn_res = None
    if not force_tiled:
        # On v7x keep >=2 Cout grid steps so ("parallel",) shards across both
        # TensorCores; on v5e/v6e fewer grid steps is strictly better.
        max_tn = Cout if n_cores == 1 else max(
            [t for t in cands if t <= max(Cout // n_cores, 128)] or [cands[-1]])
        if tn is not None:
            tn_res = tn if resident_bytes(tn) <= budget else None
        else:
            for t in cands:
                if t <= max_tn and resident_bytes(t) <= budget:
                    tn_res = t
                    break

    # TODO(synk): fuse consecutive ConvBNReLU1D layers (Cin <= 64) into one
    # kernel that keeps the (N_tile, C) activations in VMEM between layers —
    # the biggest remaining lever since each layer is HBM-bound.

    if tn_res is not None:
        grid = (Cout // tn_res,)
        kernel = functools.partial(_resident_kernel, mxu_dtype=mxu_dtype)
        return pl.pallas_call(
            kernel,
            out_shape=jax.ShapeDtypeStruct((N, Cout), out_dtype),
            grid_spec=pltpu.PrefetchScalarGridSpec(
                num_scalar_prefetch=0,
                grid=grid,
                in_specs=[
                    # TODO(synk): x's block index is constant across the grid;
                    # pipeline_mode=pl.Buffered(1) would drop its second VMEM
                    # buffer once universally supported.
                    pl.BlockSpec((N, Cin), lambda j: (0, 0)),
                    pl.BlockSpec((Cin, tn_res), lambda j: (0, j)),
                    pl.BlockSpec((2, tn_res), lambda j: (0, j)),
                ],
                out_specs=pl.BlockSpec((N, tn_res), lambda j: (0, j)),
            ),
            compiler_params=pltpu.CompilerParams(
                dimension_semantics=("parallel",),
                vmem_limit_bytes=vmem_limit),
            cost_estimate=cost,
        )(x, weight_t, gb)

    # ---- Two-phase N-tiled path (large N / v7x 64 MiB VMEM) -----------------
    assert N % 8 == 0, "N-tiled path requires N to be a multiple of 8"
    tm_cands = [t for t in range(N, 7, -8) if N % t == 0]
    if tm is not None and tn is not None:
        tm_t, tn_t = tm, tn
    else:
        tm_t = tn_t = None
        for t_n in cands:                      # prefer lane-dense (large tn) stores
            for t_m in tm_cands:               # then the largest N tile that fits
                if tiled_bytes(t_m, t_n) <= budget:
                    tm_t, tn_t = t_m, t_n
                    break
            if tm_t is not None:
                break
        if tm_t is None:                       # best-effort fallback
            tm_t, tn_t = tm_cands[-1], cands[-1]
    assert N % tm_t == 0 and Cout % tn_t == 0

    grid = (Cout // tn_t, 2, N // tm_t)
    kernel = functools.partial(_tiled_kernel, n_total=N, mxu_dtype=mxu_dtype)
    return pl.pallas_call(
        kernel,
        out_shape=jax.ShapeDtypeStruct((N, Cout), out_dtype),
        grid_spec=pltpu.PrefetchScalarGridSpec(
            num_scalar_prefetch=0,
            grid=grid,
            in_specs=[
                pl.BlockSpec((tm_t, Cin), lambda j, p, i: (i, 0)),
                pl.BlockSpec((Cin, tn_t), lambda j, p, i: (0, j)),
                pl.BlockSpec((2, tn_t), lambda j, p, i: (0, j)),
            ],
            # Phase 0 parks on block (0, j) (never re-written there), phase 1
            # writes each (i, j) block exactly once -> no garbage writebacks
            # and no doubled output HBM traffic.
            out_specs=pl.BlockSpec((tm_t, tn_t), lambda j, p, i: (i * p, j)),
            scratch_shapes=[pltpu.VMEM((1, tn_t), jnp.float32),   # sum
                            pltpu.VMEM((1, tn_t), jnp.float32),   # sumsq
                            pltpu.VMEM((1, tn_t), jnp.float32),   # scale
                            pltpu.VMEM((1, tn_t), jnp.float32)],  # shift
        ),
        compiler_params=pltpu.CompilerParams(
            dimension_semantics=("parallel", "arbitrary", "arbitrary"),
            vmem_limit_bytes=vmem_limit),
        cost_estimate=cost,
    )(x, weight_t, gb)


# ----------------------------------------------------------------------------
# Reference (faithful PyTorch forward, WITH the Linear bias) and test
# ----------------------------------------------------------------------------

def reference(x, weight_t, bias, gamma, beta):
    y = x.astype(jnp.float32) @ weight_t.astype(jnp.float32) + bias
    mean = jnp.mean(y, axis=0, keepdims=True)
    var = jnp.mean((y - mean) ** 2, axis=0, keepdims=True)
    y_hat = (y - mean) / jnp.sqrt(var + EPS)
    return jnp.maximum(gamma * y_hat + beta, 0.0)


if __name__ == "__main__":
    # Small shapes consistent with the module: batch=64, in=32, out=256.
    N, C_IN, C_OUT = 64, 32, 256

    key = jax.random.PRNGKey(0)
    k_x, k_w, k_b, k_g, k_beta = jax.random.split(key, 5)

    x = jax.random.normal(k_x, (N, C_IN), dtype=jnp.float32)
    bound = 1.0 / math.sqrt(C_IN)
    w = jax.random.uniform(k_w, (C_OUT, C_IN), jnp.float32, -bound, bound)
    weight_t = jnp.transpose(w)                        # (Cin, Cout) layout
    bias = jax.random.uniform(k_b, (1, C_OUT), jnp.float32, -bound, bound)
    gamma = 1.0 + 0.1 * jax.random.normal(k_g, (1, C_OUT), jnp.float32)
    beta = 0.1 * jax.random.normal(k_beta, (1, C_OUT), jnp.float32)

    ref = reference(x, weight_t, bias, gamma, beta)

    # 1) f32, batch-resident path (tight tolerance; proves bias-drop + fused BN).
    out = jax.block_until_ready(conv_bn_relu_1d(x, weight_t, gamma, beta, bias))
    assert out.shape == (N, C_OUT) and out.dtype == jnp.float32
    assert jnp.allclose(out, ref, atol=1e-4, rtol=1e-4), "resident f32 mismatch"

    # 2) Two-phase N-tiled path (what large-N / v7x budgets fall back to).
    out_t = jax.block_until_ready(
        conv_bn_relu_1d(x, weight_t, gamma, beta, bias,
                        force_tiled=True, tm=16, tn=128))
    assert jnp.allclose(out_t, ref, atol=1e-4, rtol=1e-4), "tiled f32 mismatch"

    # 3) bf16 MXU feed + bf16 output (recommended on v5e/v6e/v7x).
    out_bf = jax.block_until_ready(
        conv_bn_relu_1d(x, weight_t, gamma, beta, bias,
                        mxu_dtype=jnp.bfloat16, out_dtype=jnp.bfloat16))
    assert out_bf.dtype == jnp.bfloat16
    assert jnp.allclose(out_bf.astype(jnp.float32), ref, atol=7e-2, rtol=7e-2), \
        "bf16 path mismatch"

    print("KERNEL_OK")
</pallas_src>

<mosaic_0001>
module attributes {stable_mosaic.version = 11 : i64} {
  func.func @_resident_kernel(%arg0: i32, %arg1: memref<64x32xf32, #tpu.memory_space<vmem>>, %arg2: memref<32x256xf32, #tpu.memory_space<vmem>>, %arg3: memref<2x256xf32, #tpu.memory_space<vmem>>, %arg4: memref<64x256xf32, #tpu.memory_space<vmem>>) attributes {dimension_semantics = [#tpu.dimension_semantics<parallel>], iteration_bounds = array<i64: 1>, scalar_prefetch = 0 : i64, scratch_operands = 0 : i64, tpu.core_type = #tpu.core_type<tc>, window_params = [{pipeline_mode = #tpu.pipeline_mode<synchronous>, transform_indices = @transform_0, window_bounds = array<i64: 64, 32>}, {transform_indices = @transform_1, window_bounds = array<i64: 32, 256>}, {transform_indices = @transform_2, window_bounds = array<i64: 2, 256>}, {transform_indices = @transform_3, window_bounds = array<i64: 64, 256>}]} {
    %c0 = arith.constant 0 : index
    %c0_0 = arith.constant 0 : index
    %0 = vector.load %arg1[%c0, %c0_0] : memref<64x32xf32, #tpu.memory_space<vmem>>, vector<64x32xf32>
    %c0_1 = arith.constant 0 : index
    %c0_2 = arith.constant 0 : index
    %1 = vector.load %arg2[%c0_1, %c0_2] : memref<32x256xf32, #tpu.memory_space<vmem>>, vector<32x256xf32>
    %cst = arith.constant dense<0.000000e+00> : vector<64x256xf32>
    %2 = tpu.matmul %0, %1, %cst {dimension_numbers = #tpu.dot_dimension_numbers<[1], [0], [0], [1], [0, 0, 1, 1], [], []>} : vector<64x32xf32>, vector<32x256xf32>, vector<64x256xf32> -> vector<64x256xf32>
    %cst_3 = arith.constant dense<0.000000e+00> : vector<256xf32>
    %3 = vector.multi_reduction <add>, %2, %cst_3 [0] : vector<64x256xf32> to vector<256xf32>
    %4 = vector.shape_cast %3 : vector<256xf32> to vector<1x256xf32>
    %cst_4 = arith.constant 6.400000e+01 : f32
    %5 = vector.broadcast %cst_4 : f32 to vector<1x256xf32>
    %6 = arith.divf %4, %5 : vector<1x256xf32>
    %7 = arith.mulf %2, %2 : vector<64x256xf32>
    %cst_5 = arith.constant dense<0.000000e+00> : vector<256xf32>
    %8 = vector.multi_reduction <add>, %7, %cst_5 [0] : vector<64x256xf32> to vector<256xf32>
    %9 = vector.shape_cast %8 : vector<256xf32> to vector<1x256xf32>
    %cst_6 = arith.constant 6.400000e+01 : f32
    %10 = vector.broadcast %cst_6 : f32 to vector<1x256xf32>
    %11 = arith.divf %9, %10 : vector<1x256xf32>
    %12 = arith.mulf %6, %6 : vector<1x256xf32>
    %13 = arith.subf %11, %12 : vector<1x256xf32>
    %cst_7 = arith.constant 0.000000e+00 : f32
    %14 = vector.broadcast %cst_7 : f32 to vector<1x256xf32>
    %15 = arith.maximumf %13, %14 : vector<1x256xf32>
    %c0_8 = arith.constant 0 : index
    %c0_9 = arith.constant 0 : index
    %16 = vector.load %arg3[%c0_8, %c0_9] : memref<2x256xf32, #tpu.memory_space<vmem>>, vector<1x256xf32>
    %c1 = arith.constant 1 : index
    %c0_10 = arith.constant 0 : index
    %17 = vector.load %arg3[%c1, %c0_10] : memref<2x256xf32, #tpu.memory_space<vmem>>, vector<1x256xf32>
    %cst_11 = arith.constant 9.99999974E-6 : f32
    %18 = vector.broadcast %cst_11 : f32 to vector<1x256xf32>
    %19 = arith.addf %15, %18 : vector<1x256xf32>
    %20 = math.rsqrt %19 : vector<1x256xf32>
    %21 = arith.mulf %16, %20 : vector<1x256xf32>
    %22 = arith.mulf %6, %21 : vector<1x256xf32>
    %23 = arith.subf %17, %22 : vector<1x256xf32>
    %24 = vector.broadcast %21 : vector<1x256xf32> to vector<64x256xf32>
    %25 = arith.mulf %2, %24 : vector<64x256xf32>
    %26 = vector.broadcast %23 : vector<1x256xf32> to vector<64x256xf32>
    %27 = arith.addf %25, %26 : vector<64x256xf32>
    %cst_12 = arith.constant 0.000000e+00 : f32
    %28 = vector.broadcast %cst_12 : f32 to vector<64x256xf32>
    %29 = arith.maximumf %27, %28 : vector<64x256xf32>
    %c0_13 = arith.constant 0 : index
    %c0_14 = arith.constant 0 : index
    %30 = vector.load %arg4[%c0_13, %c0_14] : memref<64x256xf32, #tpu.memory_space<vmem>>, vector<64x256xf32>
    tpu.vector_store %arg4[%c0_13, %c0_14], %29 {strides = array<i32>} : memref<64x256xf32, #tpu.memory_space<vmem>>, vector<64x256xf32>,
    return
  }
  func.func @transform_0(%arg0: i32) -> (i32, i32) {
    %c0_i32 = arith.constant 0 : i32
    %c0_i32_0 = arith.constant 0 : i32
    %c0_i32_1 = arith.constant 0 : i32
    return %c0_i32, %c0_i32_0 : i32, i32
  }
  func.func @transform_1(%arg0: i32) -> (i32, i32) {
    %c0_i32 = arith.constant 0 : i32
    %c0_i32_0 = arith.constant 0 : i32
    return %c0_i32, %arg0 : i32, i32
  }
  func.func @transform_2(%arg0: i32) -> (i32, i32) {
    %c0_i32 = arith.constant 0 : i32
    %c0_i32_0 = arith.constant 0 : i32
    return %c0_i32, %arg0 : i32, i32
  }
  func.func @transform_3(%arg0: i32) -> (i32, i32) {
    %c0_i32 = arith.constant 0 : i32
    %c0_i32_0 = arith.constant 0 : i32
    return %c0_i32, %arg0 : i32, i32
  }
}

</mosaic_0001>

<llo_original>
// kernel: tpu_custom_call.1
$region0: #{tpu_custom_call.1}
  #allocation0 [shape = 'u32[]', space=smem, size = 0x4, offset = 0x4, fixed_abs, tag = 'smem constant byte address 0x4 - core index']
  #allocation1 [shape = 'u32[72,128]{1,0:T(1,128)}', space=vmem, size = 0x9000, scoped, tag = 'internal scratch']
  %s0 = inlined_call_operand.vmem [shape: f32[64,32], index: 0, kind: input, shape index: {}]
  %s1 = inlined_call_operand.vmem [shape: f32[32,256], index: 1, kind: input, shape index: {}]
  %s2 = inlined_call_operand.vmem [shape: f32[2,256], index: 2, kind: input, shape index: {}]
  %s3 = inlined_call_operand.hbm [shape: f32[64,256], index: 3, kind: output, shape index: {}]
  %s4 = sld [smem:[#allocation0]]
  $region22: #{tpu_custom_call.1} parent=0
    _
  %s6 = ssub.s32 1, %s4
  %s7 = scalar_select 0, %s6, %s4
  $region1: #{tpu_custom_call.1} parent=0
    #allocation2 [shape = 'u8[65536]{0}', space=vmem, size = 0x10000, scoped, tag = 'output window, operand 0, single buffered']
    #allocation3 [shape = 's32[1]{0}', space=sflag, size = 0x4, scoped, tag = 'scoped memory for tpu_custom_call.1']
    %8 = vsyncpa [#allocation3], 0
    // Predicated region
    $region2: #{tpu_custom_call.1} parent=1 // pred_check
      _
    $region3: #{tpu_custom_call.1} parent=1 // pred_check_branch
      %10 = sbr.rel (0) target = $region5
    $region4: #{tpu_custom_call.1} parent=1 // pred_region
      _
    $region5: #{tpu_custom_call.1} parent=1 // pred_fallthru
      _
    // Predicated region
    $region6: #{tpu_custom_call.1} parent=1 // pred_check
      _
    $region7: #{tpu_custom_call.1} parent=1 // pred_check_branch
      %12 = sbr.rel (0) target = $region9
    $region8: #{tpu_custom_call.1} parent=1 // pred_region
      _
    $region9: #{tpu_custom_call.1} parent=1 // pred_fallthru
      _
    // Predicated region
    $region10: #{tpu_custom_call.1} parent=1 // pred_check
      _
    $region11: #{tpu_custom_call.1} parent=1 // pred_check_branch
      %14 = sbr.rel (0) target = $region13
    $region12: #{tpu_custom_call.1} parent=1 // pred_region
      _
    $region13: #{tpu_custom_call.1} parent=1 // pred_fallthru
      _
    %v15 = vld [vmem:[%s0] sm:$0xff]
    %v16 = vld [vmem:[%s0 + $0x8] sm:$0xff]
    %v17 = vld [vmem:[%s0 + $0x10] sm:$0xff]
    %v18 = vld [vmem:[%s0 + $0x18] sm:$0xff]
    %v19 = vld [vmem:[%s0 + $0x20] sm:$0xff]
    %v20 = vld [vmem:[%s0 + $0x28] sm:$0xff]
    %v21 = vld [vmem:[%s0 + $0x30] sm:$0xff]
    %v22 = vld [vmem:[%s0 + $0x38] sm:$0xff]
    %v23 = vld [vmem:[%s1] sm:$0xff]
    %v24 = vld [vmem:[%s1 + $0x8] sm:$0xff]
    %v25 = vld [vmem:[%s1 + $0x10] sm:$0xff]
    %v26 = vld [vmem:[%s1 + $0x18] sm:$0xff]
    %v27 = vld [vmem:[%s1 + $0x20] sm:$0xff]
    %v28 = vld [vmem:[%s1 + $0x28] sm:$0xff]
    %v29 = vld [vmem:[%s1 + $0x30] sm:$0xff]
    %v30 = vld [vmem:[%s1 + $0x38] sm:$0xff]
    %vm31 = vcmask 261120
    %v33 = vsel %vm31, %v15, 0
    %v36 = vsel %vm31, %v16, 0
    %v39 = vsel %vm31, %v17, 0
    %v42 = vsel %vm31, %v18, 0
    %v45 = vsel %vm31, %v19, 0
    %v48 = vsel %vm31, %v20, 0
    %v51 = vsel %vm31, %v21, 0
    %v54 = vsel %vm31, %v22, 0
    %56 = vmatpush.msra.mxu0 0.0
    %57 = vmatpush.msra.mxu0 0.0
    %58 = vmatpush.msra.mxu0 0.0
    %59 = vmatpush.msra.mxu0 0.0
    %60 = vmatpush.msra.mxu0 0.0
    %61 = vmatpush.msra.mxu0 0.0
    %62 = vmatpush.msra.mxu0 0.0
    %63 = vmatpush.msra.mxu0 0.0
    %64 = vmatpush.msra.mxu0 0.0
    %65 = vmatpush.msra.mxu0 0.0
    %66 = vmatpush.msra.mxu0 0.0
    %67 = vmatpush.msra.mxu0 0.0
    %68 = vmatpush.msra.mxu0 %v29
    %69 = vmatpush.msra.mxu0 %v27
    %70 = vmatpush.msra.mxu0 %v25
    %71 = vmatpush.msra.mxu0 %v23
    %72 = vmatmul.f32.gmra.mxu0 %v33
    %v73 = vpop.f32.mrf.mxu0
    %v74 = vadd.f32 0.0, %v73
    %75 = vmatmul.f32.gmra.mxu0 %v36
    %v76 = vpop.f32.mrf.mxu0
    %v77 = vadd.f32 0.0, %v76
    %78 = vmatmul.f32.gmra.mxu0 %v39
    %v79 = vpop.f32.mrf.mxu0
    %v80 = vadd.f32 0.0, %v79
    %81 = vmatmul.f32.gmra.mxu0 %v42
    %v82 = vpop.f32.mrf.mxu0
    %v83 = vadd.f32 0.0, %v82
    %84 = vmatmul.f32.gmra.mxu0 %v45
    %v85 = vpop.f32.mrf.mxu0
    %v86 = vadd.f32 0.0, %v85
    %87 = vmatmul.f32.gmra.mxu0 %v48
    %v88 = vpop.f32.mrf.mxu0
    %v89 = vadd.f32 0.0, %v88
    %90 = vmatmul.f32.gmra.mxu0 %v51
    %v91 = vpop.f32.mrf.mxu0
    %v92 = vadd.f32 0.0, %v91
    %93 = vmatmul.f32.gmra.mxu0 %v54
    %v94 = vpop.f32.mrf.mxu0
    %v95 = vadd.f32 0.0, %v94
    %96 = vdwg.mxu0
    %97 = vmatpush.msra.mxu0 0.0
    %98 = vmatpush.msra.mxu0 0.0
    %99 = vmatpush.msra.mxu0 0.0
    %100 = vmatpush.msra.mxu0 0.0
    %101 = vmatpush.msra.mxu0 0.0
    %102 = vmatpush.msra.mxu0 0.0
    %103 = vmatpush.msra.mxu0 0.0
    %104 = vmatpush.msra.mxu0 0.0
    %105 = vmatpush.msra.mxu0 0.0
    %106 = vmatpush.msra.mxu0 0.0
    %107 = vmatpush.msra.mxu0 0.0
    %108 = vmatpush.msra.mxu0 0.0
    %109 = vmatpush.msra.mxu0 %v30
    %110 = vmatpush.msra.mxu0 %v28
    %111 = vmatpush.msra.mxu0 %v26
    %112 = vmatpush.msra.mxu0 %v24
    %113 = vmatmul.f32.gmra.mxu0 %v33
    %v114 = vpop.f32.mrf.mxu0
    %v115 = vadd.f32 0.0, %v114
    %116 = vmatmul.f32.gmra.mxu0 %v36
    %v117 = vpop.f32.mrf.mxu0
    %v118 = vadd.f32 0.0, %v117
    %119 = vmatmul.f32.gmra.mxu0 %v39
    %v120 = vpop.f32.mrf.mxu0
    %v121 = vadd.f32 0.0, %v120
    %122 = vmatmul.f32.gmra.mxu0 %v42
    %v123 = vpop.f32.mrf.mxu0
    %v124 = vadd.f32 0.0, %v123
    %125 = vmatmul.f32.gmra.mxu0 %v45
    %v126 = vpop.f32.mrf.mxu0
    %v127 = vadd.f32 0.0, %v126
    %128 = vmatmul.f32.gmra.mxu0 %v48
    %v129 = vpop.f32.mrf.mxu0
    %v130 = vadd.f32 0.0, %v129
    %131 = vmatmul.f32.gmra.mxu0 %v51
    %v132 = vpop.f32.mrf.mxu0
    %v133 = vadd.f32 0.0, %v132
    %134 = vmatmul.f32.gmra.mxu0 %v54
    %v135 = vpop.f32.mrf.mxu0
    %v136 = vadd.f32 0.0, %v135
    %137 = vdwg.mxu0
    %v138 = vadd.f32 %v74, %v77
    %v139 = vadd.f32 %v138, %v80
    %v140 = vadd.f32 %v139, %v83
    %v141 = vadd.f32 %v140, %v86
    %v142 = vadd.f32 %v141, %v89
    %v143 = vadd.f32 %v142, %v92
    %v144 = vadd.f32 %v143, %v95
    %v145 = vrot.slane %v144, 4
    %v146 = vadd.f32 %v144, %v145
    %v147 = vrot.slane %v146, 2
    %v148 = vadd.f32 %v146, %v147
    %v149 = vrot.slane %v148, 1
    %v150 = vadd.f32 %v148, %v149
    %v151 = vadd.f32 %v115, %v118
    %v152 = vadd.f32 %v151, %v121
    %v153 = vadd.f32 %v152, %v124
    %v154 = vadd.f32 %v153, %v127
    %v155 = vadd.f32 %v154, %v130
    %v156 = vadd.f32 %v155, %v133
    %v157 = vadd.f32 %v156, %v136
    %v158 = vrot.slane %v157, 4
    %v159 = vadd.f32 %v157, %v158
    %v160 = vrot.slane %v159, 2
    %v161 = vadd.f32 %v159, %v160
    %v162 = vrot.slane %v161, 1
    %v163 = vadd.f32 %v161, %v162
    %v164 = vrcp.pop 64.0
    %v165 = vmul.f32 64.0, %v164
    %v166 = vsub.f32 1.0, %v165
    %v167 = vmul.f32 %v164, %v166
    %v168 = vadd.f32 %v164, %v167
    %vm169 = vweird.f32 %v164
    %v170 = vsel %vm169, %v164, %v168
    %v171 = vmul.f32 %v150, %v170
    %v172 = vmul.f32 %v163, %v170
    %v173 = vmul.f32 %v74, %v74
    %v174 = vmul.f32 %v115, %v115
    %v175 = vmul.f32 %v77, %v77
    %v176 = vmul.f32 %v118, %v118
    %v177 = vmul.f32 %v80, %v80
    %v178 = vmul.f32 %v121, %v121
    %v179 = vmul.f32 %v83, %v83
    %v180 = vmul.f32 %v124, %v124
    %v181 = vmul.f32 %v86, %v86
    %v182 = vmul.f32 %v127, %v127
    %v183 = vmul.f32 %v89, %v89
    %v184 = vmul.f32 %v130, %v130
    %v185 = vmul.f32 %v92, %v92
    %v186 = vmul.f32 %v133, %v133
    %v187 = vmul.f32 %v95, %v95
    %v188 = vmul.f32 %v136, %v136
    %v189 = vadd.f32 %v173, %v175
    %v190 = vadd.f32 %v189, %v177
    %v191 = vadd.f32 %v190, %v179
    %v192 = vadd.f32 %v191, %v181
    %v193 = vadd.f32 %v192, %v183
    %v194 = vadd.f32 %v193, %v185
    %v195 = vadd.f32 %v194, %v187
    %v196 = vrot.slane %v195, 4
    %v197 = vadd.f32 %v195, %v196
    %v198 = vrot.slane %v197, 2
    %v199 = vadd.f32 %v197, %v198
    %v200 = vrot.slane %v199, 1
    %v201 = vadd.f32 %v199, %v200
    %v202 = vadd.f32 %v174, %v176
    %v203 = vadd.f32 %v202, %v178
    %v204 = vadd.f32 %v203, %v180
    %v205 = vadd.f32 %v204, %v182
    %v206 = vadd.f32 %v205, %v184
    %v207 = vadd.f32 %v206, %v186
    %v208 = vadd.f32 %v207, %v188
    %v209 = vrot.slane %v208, 4
    %v210 = vadd.f32 %v208, %v209
    %v211 = vrot.slane %v210, 2
    %v212 = vadd.f32 %v210, %v211
    %v213 = vrot.slane %v212, 1
    %v214 = vadd.f32 %v212, %v213
    %v215 = vmul.f32 %v201, %v170
    %v216 = vmul.f32 %v214, %v170
    %v217 = vmul.f32 %v171, %v171
    %v218 = vmul.f32 %v172, %v172
    %v219 = vsub.f32 %v215, %v217
    %v220 = vsub.f32 %v216, %v218
    %v221 = vmax.f32 %v219, 0.0
    %v222 = vmax.f32 %v220, 0.0
    %v223 = vld [vmem:[%s2] ss:$2 sm:$0x3]
    %s224 = scalar_lea.vmem %s2, 1
    %v225 = vld [vmem:[%s224] ss:$2 sm:$0x3]
    %v226 = vadd.f32 %v221, 1e-05
    %v227 = vadd.f32 %v222, 1e-05
    %v228 = vrsqrt.pop %v226
    %v229 = vmul.f32 %v228, %v226
    %v230 = vmul.f32 %v229, %v228
    %v231 = vmul.f32 0.5, %v230
    %v232 = vsub.f32 1.5, %v231
    %v233 = vmul.f32 %v228, %v232
    %vm234 = vweird.f32 %v226
    %vm235 = vweird.f32 %v228
    %vm236 = vmor %vm234, %vm235
    %v237 = vsel %vm236, %v228, %v233
    %v238 = vrsqrt.pop %v227
    %v239 = vmul.f32 %v238, %v227
    %v240 = vmul.f32 %v239, %v238
    %v241 = vmul.f32 0.5, %v240
    %v242 = vsub.f32 1.5, %v241
    %v243 = vmul.f32 %v238, %v242
    %vm244 = vweird.f32 %v227
    %vm245 = vweird.f32 %v238
    %vm246 = vmor %vm244, %vm245
    %v247 = vsel %vm246, %v238, %v243
    %v250 = vrot.slane %v247, 7
    %vm251 = vcmask 1040384
    %v252 = vsel %vm251, %v237, %v250
    %v254 = vmul.f32 %v223, %v252
    %v256 = vperm.slane %v254, 0
    %v257 = vperm.slane %v254, 1
    %v260 = vmul.f32 %v171, %v256
    %v261 = vmul.f32 %v172, %v257
    %v264 = vrot.slane %v261, 7
    %v265 = vsel %vm251, %v260, %v264
    %v267 = vsub.f32 %v225, %v265
    %v268 = vmul.f32 %v74, %v256
    %v269 = vmul.f32 %v115, %v257
    %v270 = vmul.f32 %v77, %v256
    %v271 = vmul.f32 %v118, %v257
    %v272 = vmul.f32 %v80, %v256
    %v273 = vmul.f32 %v121, %v257
    %v274 = vmul.f32 %v83, %v256
    %v275 = vmul.f32 %v124, %v257
    %v276 = vmul.f32 %v86, %v256
    %v277 = vmul.f32 %v127, %v257
    %v278 = vmul.f32 %v89, %v256
    %v279 = vmul.f32 %v130, %v257
    %v280 = vmul.f32 %v92, %v256
    %v281 = vmul.f32 %v133, %v257
    %v282 = vmul.f32 %v95, %v256
    %v283 = vmul.f32 %v136, %v257
    %v285 = vperm.slane %v267, 0
    %v286 = vperm.slane %v267, 1
    %v289 = vadd.f32 %v268, %v285
    %v290 = vadd.f32 %v269, %v286
    %v291 = vadd.f32 %v270, %v285
    %v292 = vadd.f32 %v271, %v286
    %v293 = vadd.f32 %v272, %v285
    %v294 = vadd.f32 %v273, %v286
    %v295 = vadd.f32 %v274, %v285
    %v296 = vadd.f32 %v275, %v286
    %v297 = vadd.f32 %v276, %v285
    %v298 = vadd.f32 %v277, %v286
    %v299 = vadd.f32 %v278, %v285
    %v300 = vadd.f32 %v279, %v286
    %v301 = vadd.f32 %v280, %v285
    %v302 = vadd.f32 %v281, %v286
    %v303 = vadd.f32 %v282, %v285
    %v304 = vadd.f32 %v283, %v286
    %v305 = vmax.f32 %v289, 0.0
    %v306 = vmax.f32 %v290, 0.0
    %v307 = vmax.f32 %v291, 0.0
    %v308 = vmax.f32 %v292, 0.0
    %v309 = vmax.f32 %v293, 0.0
    %v310 = vmax.f32 %v294, 0.0
    %v311 = vmax.f32 %v295, 0.0
    %v312 = vmax.f32 %v296, 0.0
    %v313 = vmax.f32 %v297, 0.0
    %v314 = vmax.f32 %v298, 0.0
    %v315 = vmax.f32 %v299, 0.0
    %v316 = vmax.f32 %v300, 0.0
    %v317 = vmax.f32 %v301, 0.0
    %v318 = vmax.f32 %v302, 0.0
    %v319 = vmax.f32 %v303, 0.0
    %v320 = vmax.f32 %v304, 0.0
    %321 = vst [vmem:[#allocation2] sm:$0xff] %v305
    %322 = vst [vmem:[#allocation2 + $0x8] sm:$0xff] %v306
    %323 = vst [vmem:[#allocation2 + $0x10] sm:$0xff] %v307
    %324 = vst [vmem:[#allocation2 + $0x18] sm:$0xff] %v308
    %325 = vst [vmem:[#allocation2 + $0x20] sm:$0xff] %v309
    %326 = vst [vmem:[#allocation2 + $0x28] sm:$0xff] %v310
    %327 = vst [vmem:[#allocation2 + $0x30] sm:$0xff] %v311
    %328 = vst [vmem:[#allocation2 + $0x38] sm:$0xff] %v312
    %329 = vst [vmem:[#allocation2 + $0x40] sm:$0xff] %v313
    %330 = vst [vmem:[#allocation2 + $0x48] sm:$0xff] %v314
    %331 = vst [vmem:[#allocation2 + $0x50] sm:$0xff] %v315
    %332 = vst [vmem:[#allocation2 + $0x58] sm:$0xff] %v316
    %333 = vst [vmem:[#allocation2 + $0x60] sm:$0xff] %v317
    %334 = vst [vmem:[#allocation2 + $0x68] sm:$0xff] %v318
    %335 = vst [vmem:[#allocation2 + $0x70] sm:$0xff] %v319
    %336 = vst [vmem:[#allocation2 + $0x78] sm:$0xff] %v320
    // Predicated region
    $region14: #{tpu_custom_call.1} parent=1 // pred_check
      _
    $region15: #{tpu_custom_call.1} parent=1 // pred_check_branch
      %338 = sbr.rel (0) target = $region17
    $region16: #{tpu_custom_call.1} parent=1 // pred_region
      %340 = vsyncadd [#allocation3], 0
      %s341 = sshll.u32 [#allocation2], 4
      %s342 = int_to_ptr.vmem [resolvable:$true] %s341
      %s343 = sshll.u32 %s3, 4
      %s344 = int_to_ptr.hbm [resolvable:$true] %s343
      %349 = dma.vmem_to_hbm [thread:$0]  %s342, 2048, %s344, [#allocation3], 256, 256, 16
    $region17: #{tpu_custom_call.1} parent=1 // pred_fallthru
      _
    // Predicated region
    $region18: #{tpu_custom_call.1} parent=1 // pred_check
      _
    $region19: #{tpu_custom_call.1} parent=1 // pred_check_branch
      %351 = sbr.rel (0) target = $region21
    $region20: #{tpu_custom_call.1} parent=1 // pred_region
      %353 = dma.done [#allocation3], 2048
    $region21: #{tpu_custom_call.1} parent=1 // pred_fallthru
      _
    %354 = vsyncpa [#allocation3], 1

</llo_original>
